<compile_context>
chip_gen: v7x
topology: tpu7x:2x2x1
jax: 0.10.0
libtpu: 0.0.40
codegen_flags: <defaults>
</compile_context>

<pallas_src>
import functools

import jax
import jax.numpy as jnp
from jax.experimental import pallas as pl
from jax.experimental.pallas import tpu as pltpu


# ----------------------------------------------------------------------------
# helpers
# ----------------------------------------------------------------------------
def _round_up(x, m):
    return ((x + m - 1) // m) * m


_LANES = 128
_N_STANCE = 4   # classifier0: Linear(hidden, 4)
_N_VIRAL = 2    # classifier1: Linear(hidden, 2)


def _vmem_limit_bytes():
    """Scoped-VMEM budget used for the dice kernel (¾ of physical, capped)."""
    cap = 64 * 1024 * 1024                       # safe v7x-sized fallback
    try:
        cap = int(pltpu.get_tpu_info().vmem_capacity_bytes)
    except Exception:
        pass
    return min(int(cap * 3 // 4), 100 * 1024 * 1024)


# ----------------------------------------------------------------------------
# mtt_Bertweet head kernels: dropout + fused (stance, viral) classifiers
# ----------------------------------------------------------------------------
def _heads_kernel(x_ref, w_ref, b_ref, out_ref):
    # eval path: pooled @ W_packed + b_packed  (bf16 MXU operands, f32 acc)
    y = jnp.dot(x_ref[...], w_ref[...], preferred_element_type=jnp.float32)
    out_ref[...] = (y + b_ref[...]).astype(out_ref.dtype)


def _heads_kernel_masked(x_ref, m_ref, w_ref, b_ref, out_ref):
    # training path: mask already carries 1/(1-p) on kept elements, so dropout
    # costs a single fused (TB,H) multiply before the MXU.
    x = x_ref[...] * m_ref[...]
    y = jnp.dot(x, w_ref[...], preferred_element_type=jnp.float32)
    out_ref[...] = (y + b_ref[...]).astype(out_ref.dtype)


def pack_mtt_bertweet_heads(stance_w, stance_b, viral_w, viral_b,
                            dtype=jnp.bfloat16):
    """Pack both classifier heads into one zero-padded (H, 128) weight (bf16)
    and a (1, 128) f32 bias.  Do this ONCE at parameter time and reuse."""
    H = stance_w.shape[1]
    assert stance_w.shape == (_N_STANCE, H) and stance_b.shape == (_N_STANCE,)
    assert viral_w.shape == (_N_VIRAL, H) and viral_b.shape == (_N_VIRAL,)
    w = jnp.zeros((H, _LANES), jnp.float32)
    w = w.at[:, :_N_STANCE].set(stance_w.T.astype(jnp.float32))
    w = w.at[:, _N_STANCE:_N_STANCE + _N_VIRAL].set(viral_w.T.astype(jnp.float32))
    b = jnp.zeros((1, _LANES), jnp.float32)
    b = b.at[:, :_N_STANCE].set(stance_b.astype(jnp.float32)[None, :])
    b = b.at[:, _N_STANCE:_N_STANCE + _N_VIRAL].set(viral_b.astype(jnp.float32)[None, :])
    return w.astype(dtype), b


def mtt_bertweet_heads(pooled, stance_w=None, stance_b=None, viral_w=None,
                       viral_b=None, *, packed=None, dropout=0.1,
                       training=False, task="stance", seed=0, row_tile=None):
    """Pallas equivalent of mtt_Bertweet.forward AFTER the BERTweet encoder:

        pooled_output = dropout0(outputs[1])
        stance_logits = classifier0(pooled_output)   # if task in {stance, multi}
        viral_logits  = classifier1(pooled_output)   # if task in {viral, multi}

    Returns (stance_logits | None, viral_logits | None), like the torch module.
    """
    if task not in ("stance", "multi", "viral"):
        raise Exception("Task not found: " + task)

    B, H = pooled.shape
    if packed is None:
        if stance_w is None or viral_w is None:
            raise ValueError("pass either raw head weights or packed=")
        packed = pack_mtt_bertweet_heads(stance_w, stance_b, viral_w, viral_b)
    w_packed, b_packed = packed
    assert w_packed.shape == (H, _LANES) and b_packed.shape == (1, _LANES)
    cdt = w_packed.dtype                      # bf16 MXU operand dtype

    # Row tiling: collapse to a single grid step whenever the batch fits a few
    # MiB of VMEM (always true for BERTweet batches); otherwise 512-row tiles.
    if row_tile is None:
        tb = _round_up(B, 16)
        if tb > 1024:
            tb = 512
    else:
        tb = max(16, _round_up(int(row_tile), 16))
    b_pad = _round_up(B, tb)

    x = pooled.astype(cdt)
    if b_pad != B:
        x = jnp.pad(x, ((0, b_pad - B), (0, 0)))

    use_mask = bool(training) and float(dropout) > 0.0
    args = [x]
    in_specs = [pl.BlockSpec((tb, H), lambda i: (i, 0))]
    if use_mask:
        # TODO(synk): the on-chip hardware PRNG (pltpu.prng_seed /
        # prng_random_bits) has no interpret-mode lowering, so the Bernoulli
        # keep-mask is drawn here; the 1/(1-p) scale is folded into the mask.
        keep = jax.random.bernoulli(jax.random.PRNGKey(int(seed)),
                                    1.0 - float(dropout), (b_pad, H))
        mask = jnp.where(keep, jnp.float32(1.0 / (1.0 - float(dropout))),
                         jnp.float32(0.0)).astype(cdt)
        args.append(mask)
        in_specs.append(pl.BlockSpec((tb, H), lambda i: (i, 0)))
        kernel = _heads_kernel_masked
    else:
        kernel = _heads_kernel
    args.extend([w_packed, b_packed])
    in_specs.extend([pl.BlockSpec((H, _LANES), lambda i: (0, 0)),
                     pl.BlockSpec((1, _LANES), lambda i: (0, 0))])

    out = pl.pallas_call(
        kernel,
        out_shape=jax.ShapeDtypeStruct((b_pad, _LANES), jnp.float32),
        grid=(b_pad // tb,),
        in_specs=in_specs,
        out_specs=pl.BlockSpec((tb, _LANES), lambda i: (i, 0)),
        compiler_params=pltpu.CompilerParams(
            dimension_semantics=("parallel",)),   # independent rows → megacore
    )(*args)

    stance_logits = out[:B, :_N_STANCE] if task in ("stance", "multi") else None
    viral_logits = (out[:B, _N_STANCE:_N_STANCE + _N_VIRAL]
                    if task in ("viral", "multi") else None)
    # TODO(synk): the pretrained BERTweet encoder producing `pooled`
    # (outputs[1]) and the passthrough of outputs[2:] have no in-script
    # Pallas equivalent.
    return stance_logits, viral_logits


# ----------------------------------------------------------------------------
# Self-Adjusting Dice loss
# ----------------------------------------------------------------------------
def _sadl_kernel(nvalid_ref, logits_ref, targets_ref, out_ref, *,
                 alpha, gamma, reduction, lane_dense):
    i = pl.program_id(0)
    tn = logits_ref.shape[0]

    x = logits_ref[...].astype(jnp.float32)                    # (TN, C)
    tgt = targets_ref[...]                                      # (TN, 1) int32

    # stable softmax pieces; gather the target column from the exponentials so
    # the full probs matrix is never materialized.
    m = jnp.max(x, axis=1, keepdims=True)
    e = jnp.exp(x - m)                                          # (TN, C)
    denom = jnp.sum(e, axis=1, keepdims=True)                   # (TN, 1)
    col = jax.lax.broadcasted_iota(jnp.int32, x.shape, 1)
    e_t = jnp.sum(jnp.where(col == tgt, e, 0.0), axis=1, keepdims=True)
    # plain f32 divide (portable; approx-reciprocal is Mosaic-only)
    p = e_t / denom                                             # (TN, 1)

    # (1 - p) ** alpha, specialized for integer alphas (avoids pow's exp/log).
    a = float(alpha)
    if a == 1.0:
        factor = 1.0 - p
    elif a == float(int(a)) and 0.0 < a <= 8.0:
        omp = 1.0 - p
        factor = omp
        for _ in range(int(a) - 1):
            factor = factor * omp
    else:
        factor = jnp.exp(a * jnp.log(jnp.clip(1.0 - p, 1e-30, 1.0)))
    pwf = factor * p
    loss = 1.0 - (2.0 * pwf + gamma) / (pwf + 1.0 + gamma)      # (TN, 1)

    if reduction == "none":
        if lane_dense:
            # Lane-dense (1, TN) store: relayout the per-row column into a row
            # via masked broadcast + sublane reduce (portable on Mosaic and in
            # interpret mode; avoids a (TN,1)->(1,TN) transpose).
            r_i = jax.lax.broadcasted_iota(jnp.int32, (tn, tn), 0)
            c_i = jax.lax.broadcasted_iota(jnp.int32, (tn, tn), 1)
            out_ref[...] = jnp.sum(jnp.where(r_i == c_i, loss, 0.0),
                                   axis=0, keepdims=True)       # (1, TN)
        else:
            # TODO(synk): sub-128-row tiles (vocab-scale C) keep the masked
            # column-store layout.
            out_ref[...] = loss
    else:
        # mask rows added by padding so they never contribute to the reduction
        row = jax.lax.broadcasted_iota(jnp.int32, loss.shape, 0) + i * tn
        tile_sum = jnp.sum(jnp.where(row < nvalid_ref[0], loss, 0.0))

        @pl.when(i == 0)
        def _init():
            out_ref[...] = jnp.zeros(out_ref.shape, out_ref.dtype)

        out_ref[...] += tile_sum.reshape(1, 1)


def _dice_row_tile(n, c, itemsize, vmem_limit):
    # Per-tile working set ≈ double-buffered logits block (2·TN·C·itemsize)
    # plus ~5 f32 intermediates of shape (TN, C) (x, e, iota, compare, select).
    budget = max(vmem_limit // 2, 2 * 1024 * 1024)
    per_row = c * (2 * itemsize + 5 * 4)
    tn = budget // max(1, per_row)
    tn = max(8, min(1024, (tn // 8) * 8))
    return min(tn, _round_up(max(n, 1), 8))


def self_adj_dice_loss(logits, targets, alpha=1.0, gamma=1.0, reduction="mean",
                       row_tile=None):
    """Self-adjusting dice loss ("Dice Loss for Data-imbalanced NLP Tasks").

    logits: (N, C) float (f32 or bf16), targets: (N,) int class indices.
    """
    N, C = logits.shape
    if reduction is None:
        reduction = "none"
    if reduction not in ("mean", "sum", "none"):
        raise NotImplementedError(f"Reduction `{reduction}` is not supported.")

    vmem_limit = _vmem_limit_bytes()
    itemsize = jnp.dtype(logits.dtype).itemsize
    tn = (int(row_tile) if row_tile is not None
          else _dice_row_tile(N, C, itemsize, vmem_limit))
    tn = max(8, _round_up(tn, 8))

    lane_dense = False
    if reduction == "none":
        full = _round_up(N, 8)
        if tn >= full:
            tn = full                       # single tile → full-dim block is legal
            lane_dense = True
        elif tn >= 128:
            tn = min((tn // 128) * 128, 512)  # lane blocks must be 128-multiples
            lane_dense = True
        # else: tn < 128 (vocab-scale C) → column-layout fallback.
        # TODO(synk): online-softmax class-axis tiling for vocab-scale C; the
        # realistic C for this module is 2/4, so it is not implemented here.

    n_pad = _round_up(N, tn)
    if n_pad != N:
        logits = jnp.pad(logits, ((0, n_pad - N), (0, 0)))
        targets = jnp.pad(targets, (0, n_pad - N))
    targets2d = targets.astype(jnp.int32).reshape(n_pad, 1)
    nvalid = jnp.array([N], dtype=jnp.int32)

    if reduction == "none":
        if lane_dense:
            out_shape = jax.ShapeDtypeStruct((1, n_pad), jnp.float32)
            out_spec = pl.BlockSpec((1, tn), lambda i, n: (0, i))
        else:
            out_shape = jax.ShapeDtypeStruct((n_pad, 1), jnp.float32)
            out_spec = pl.BlockSpec((tn, 1), lambda i, n: (i, 0))
        dim_sem = ("parallel",)             # independent rows
    else:
        out_shape = jax.ShapeDtypeStruct((1, 1), jnp.float32)
        out_spec = pl.BlockSpec((1, 1), lambda i, n: (0, 0))
        dim_sem = ("arbitrary",)            # reduction axis (accumulator)
        # TODO(synk): v7x two-TensorCore split of the reduction grid axis.

    kernel = functools.partial(_sadl_kernel, alpha=float(alpha),
                               gamma=float(gamma), reduction=reduction,
                               lane_dense=lane_dense)
    out = pl.pallas_call(
        kernel,
        out_shape=out_shape,
        grid_spec=pltpu.PrefetchScalarGridSpec(
            num_scalar_prefetch=1,          # global N (padding mask) in SMEM
            grid=(n_pad // tn,),
            in_specs=[
                pl.BlockSpec((tn, C), lambda i, n: (i, 0)),
                pl.BlockSpec((tn, 1), lambda i, n: (i, 0)),
            ],
            out_specs=out_spec,
        ),
        compiler_params=pltpu.CompilerParams(
            dimension_semantics=dim_sem, vmem_limit_bytes=vmem_limit),
    )(nvalid, logits, targets2d)

    if reduction == "none":
        return out[0, :N] if lane_dense else out[:N, 0]
    total = out[0, 0]
    if reduction == "mean":
        total = total / jnp.float32(N)      # global divisor (tiling-safe)
    return total


# ----------------------------------------------------------------------------
# references + tests
# ----------------------------------------------------------------------------
def _dice_reference(logits, targets, alpha, gamma):
    probs = jax.nn.softmax(logits.astype(jnp.float32), axis=1)
    p = jnp.take_along_axis(probs, targets[:, None], axis=1)
    pwf = ((1.0 - p) ** alpha) * p
    return 1.0 - (2.0 * pwf + gamma) / (pwf + 1.0 + gamma)      # (N, 1)


if __name__ == "__main__":
    key = jax.random.PRNGKey(0)
    ks = jax.random.split(key, 10)

    # ---------------- mtt_Bertweet heads ----------------
    B, H = 20, 768                     # bertweet-base hidden size = 768
    pooled = jax.random.normal(ks[0], (B, H), dtype=jnp.float32)
    w0 = jax.random.normal(ks[1], (_N_STANCE, H), dtype=jnp.float32) * 0.02
    b0 = jax.random.normal(ks[2], (_N_STANCE,), dtype=jnp.float32) * 0.02
    w1 = jax.random.normal(ks[3], (_N_VIRAL, H), dtype=jnp.float32) * 0.02
    b1 = jax.random.normal(ks[4], (_N_VIRAL,), dtype=jnp.float32) * 0.02

    packed = pack_mtt_bertweet_heads(w0, b0, w1, b1)   # packed once, reused

    # bf16-consistent reference (kernel feeds bf16 operands to the MXU, f32 acc)
    bf = jnp.bfloat16
    hp = jax.lax.Precision.HIGHEST
    xr = pooled.astype(bf).astype(jnp.float32)
    ref_s = jnp.dot(xr, w0.T.astype(bf).astype(jnp.float32), precision=hp) + b0
    ref_v = jnp.dot(xr, w1.T.astype(bf).astype(jnp.float32), precision=hp) + b1

    stance, viral = mtt_bertweet_heads(pooled, packed=packed, dropout=0.1,
                                       training=False, task="multi")
    stance = jax.block_until_ready(stance)
    assert stance.shape == (B, _N_STANCE) and viral.shape == (B, _N_VIRAL)
    assert jnp.allclose(stance, ref_s, atol=2e-3, rtol=2e-3), "stance head mismatch"
    assert jnp.allclose(viral, ref_v, atol=2e-3, rtol=2e-3), "viral head mismatch"

    s_only, v_none = mtt_bertweet_heads(pooled, w0, b0, w1, b1, dropout=0.1,
                                        training=False, task="stance")
    assert v_none is None and jnp.allclose(s_only, ref_s, atol=2e-3, rtol=2e-3)

    s_none, v_only = mtt_bertweet_heads(pooled, packed=packed, dropout=0.1,
                                        training=False, task="viral")
    assert s_none is None and jnp.allclose(v_only, ref_v, atol=2e-3, rtol=2e-3)

    # training-mode dropout (stochastic): shapes / finiteness smoke test
    s_tr, v_tr = mtt_bertweet_heads(pooled, packed=packed, dropout=0.3,
                                    training=True, task="multi", seed=123)
    s_tr = jax.block_until_ready(s_tr)
    assert s_tr.shape == (B, _N_STANCE) and bool(jnp.all(jnp.isfinite(s_tr)))
    assert v_tr.shape == (B, _N_VIRAL) and bool(jnp.all(jnp.isfinite(v_tr)))

    # ---------------- Self-adjusting dice loss ----------------
    # single-tile path (default tiling)
    N1, C1 = 20, 160
    logits1 = jax.random.normal(ks[5], (N1, C1), dtype=jnp.float32)
    targets1 = jax.random.randint(ks[6], (N1,), 0, C1, dtype=jnp.int32)
    ref1 = _dice_reference(logits1, targets1, alpha=1.0, gamma=1.0)

    got_mean = self_adj_dice_loss(logits1, targets1, alpha=1.0, gamma=1.0,
                                  reduction="mean")
    got_mean = jax.block_until_ready(got_mean)
    assert jnp.allclose(got_mean, ref1.mean(), atol=1e-4, rtol=1e-4), \
        (got_mean, ref1.mean())

    got_none1 = self_adj_dice_loss(logits1, targets1, alpha=1.0, gamma=1.0,
                                   reduction="none")
    assert got_none1.shape == (N1,)
    assert jnp.allclose(got_none1, ref1[:, 0], atol=1e-4, rtol=1e-4)

    # multi-tile path (grid of 3 tiles + row padding, lane-dense 'none' output)
    N2, C2 = 300, 256
    logits2 = jax.random.normal(ks[7], (N2, C2), dtype=jnp.float32)
    targets2 = jax.random.randint(ks[8], (N2,), 0, C2, dtype=jnp.int32)
    ref2 = _dice_reference(logits2, targets2, alpha=2.0, gamma=0.5)

    got_sum = self_adj_dice_loss(logits2, targets2, alpha=2.0, gamma=0.5,
                                 reduction="sum", row_tile=128)
    assert jnp.allclose(got_sum, ref2.sum(), atol=1e-3, rtol=1e-4)

    got_none2 = self_adj_dice_loss(logits2, targets2, alpha=2.0, gamma=0.5,
                                   reduction="none", row_tile=128)
    assert got_none2.shape == (N2,)
    assert jnp.allclose(got_none2, ref2[:, 0], atol=1e-4, rtol=1e-4)

    print("KERNEL_OK")
</pallas_src>

<mosaic_0001>
module attributes {stable_mosaic.version = 11 : i64} {
  func.func @_heads_kernel(%arg0: i32, %arg1: memref<32x768xbf16, #tpu.memory_space<vmem>>, %arg2: memref<768x128xbf16, #tpu.memory_space<vmem>>, %arg3: memref<1x128xf32, #tpu.memory_space<vmem>>, %arg4: memref<32x128xf32, #tpu.memory_space<vmem>>) attributes {dimension_semantics = [#tpu.dimension_semantics<parallel>], iteration_bounds = array<i64: 1>, scalar_prefetch = 0 : i64, scratch_operands = 0 : i64, tpu.core_type = #tpu.core_type<tc>, window_params = [{transform_indices = @transform_0, window_bounds = array<i64: 32, 768>}, {pipeline_mode = #tpu.pipeline_mode<synchronous>, transform_indices = @transform_1, window_bounds = array<i64: 768, 128>}, {pipeline_mode = #tpu.pipeline_mode<synchronous>, transform_indices = @transform_2, window_bounds = array<i64: 1, 128>}, {transform_indices = @transform_3, window_bounds = array<i64: 32, 128>}]} {
    %c0 = arith.constant 0 : index
    %c0_0 = arith.constant 0 : index
    %0 = vector.load %arg1[%c0, %c0_0] : memref<32x768xbf16, #tpu.memory_space<vmem>>, vector<32x768xbf16>
    %c0_1 = arith.constant 0 : index
    %c0_2 = arith.constant 0 : index
    %1 = vector.load %arg2[%c0_1, %c0_2] : memref<768x128xbf16, #tpu.memory_space<vmem>>, vector<768x128xbf16>
    %cst = arith.constant dense<0.000000e+00> : vector<32x128xf32>
    %2 = tpu.matmul %0, %1, %cst {dimension_numbers = #tpu.dot_dimension_numbers<[1], [0], [0], [1], [0, 0, 1, 1], [], []>} : vector<32x768xbf16>, vector<768x128xbf16>, vector<32x128xf32> -> vector<32x128xf32>
    %c0_3 = arith.constant 0 : index
    %c0_4 = arith.constant 0 : index
    %3 = vector.load %arg3[%c0_3, %c0_4] : memref<1x128xf32, #tpu.memory_space<vmem>>, vector<1x128xf32>
    %4 = vector.broadcast %3 : vector<1x128xf32> to vector<32x128xf32>
    %5 = arith.addf %2, %4 : vector<32x128xf32>
    %c0_5 = arith.constant 0 : index
    %c0_6 = arith.constant 0 : index
    %6 = vector.load %arg4[%c0_5, %c0_6] : memref<32x128xf32, #tpu.memory_space<vmem>>, vector<32x128xf32>
    tpu.vector_store %arg4[%c0_5, %c0_6], %5 {strides = array<i32>} : memref<32x128xf32, #tpu.memory_space<vmem>>, vector<32x128xf32>,
    return
  }
  func.func @transform_0(%arg0: i32) -> (i32, i32) {
    %c0_i32 = arith.constant 0 : i32
    %c0_i32_0 = arith.constant 0 : i32
    return %arg0, %c0_i32 : i32, i32
  }
  func.func @transform_1(%arg0: i32) -> (i32, i32) {
    %c0_i32 = arith.constant 0 : i32
    %c0_i32_0 = arith.constant 0 : i32
    %c0_i32_1 = arith.constant 0 : i32
    return %c0_i32, %c0_i32_0 : i32, i32
  }
  func.func @transform_2(%arg0: i32) -> (i32, i32) {
    %c0_i32 = arith.constant 0 : i32
    %c0_i32_0 = arith.constant 0 : i32
    %c0_i32_1 = arith.constant 0 : i32
    return %c0_i32, %c0_i32_0 : i32, i32
  }
  func.func @transform_3(%arg0: i32) -> (i32, i32) {
    %c0_i32 = arith.constant 0 : i32
    %c0_i32_0 = arith.constant 0 : i32
    return %arg0, %c0_i32 : i32, i32
  }
}

</mosaic_0001>

<llo_original>
// kernel: tpu_custom_call.1
$region0: #{tpu_custom_call.1}
  #allocation0 [shape = 'u32[]', space=smem, size = 0x4, offset = 0x4, fixed_abs, tag = 'smem constant byte address 0x4 - core index']
  #allocation1 [shape = 'u32[144,128]{1,0:T(1,128)}', space=vmem, size = 0x12000, scoped, tag = 'internal scratch']
  %s0 = inlined_call_operand.hbm [shape: bf16[32,768], index: 0, kind: input, shape index: {}]
  %s1 = inlined_call_operand.hbm [shape: bf16[768,128], index: 1, kind: input, shape index: {}]
  %s2 = inlined_call_operand.vmem [shape: f32[1,128], index: 2, kind: input, shape index: {}]
  %s3 = inlined_call_operand.hbm [shape: f32[32,128], index: 3, kind: output, shape index: {}]
  %s4 = sld [smem:[#allocation0]]
  $region30: #{tpu_custom_call.1} parent=0
    _
  %s6 = ssub.s32 1, %s4
  %s7 = scalar_select 0, %s6, %s4
  $region1: #{tpu_custom_call.1} parent=0
    #allocation2 [shape = 'u8[49152]{0}', space=vmem, size = 0xc000, scoped, tag = 'input window, operand 0, single buffered']
    #allocation3 [shape = 's32[1]{0}', space=sflag, size = 0x4, scoped, tag = 'scoped memory for tpu_custom_call.1']
    #allocation4 [shape = 's32[1]{0}', space=sflag, size = 0x4, scoped, tag = 'scoped memory for tpu_custom_call.1']
    #allocation5 [shape = 'u8[196608]{0}', space=vmem, size = 0x30000, scoped, tag = 'input window, operand 1, single buffered']
    #allocation6 [shape = 's32[1]{0}', space=sflag, size = 0x4, scoped, tag = 'scoped memory for tpu_custom_call.1']
    #allocation7 [shape = 'u8[16384]{0}', space=vmem, size = 0x4000, scoped, tag = 'output window, operand 0, single buffered']
    %8 = vsyncpa [#allocation3], 0
    %9 = vsyncpa [#allocation6], 0
    %10 = vsyncpa [#allocation4], 0
    // Predicated region
    $region2: #{tpu_custom_call.1} parent=1 // pred_check
      _
    $region3: #{tpu_custom_call.1} parent=1 // pred_check_branch
      %12 = sbr.rel (0) target = $region5
    $region4: #{tpu_custom_call.1} parent=1 // pred_region
      %s14 = ssub.s32 1536, 1536
      %15 = vsyncadd [#allocation3], %s14
      %s16 = sshll.u32 [#allocation2], 4
      %s17 = int_to_ptr.vmem [resolvable:$true] %s16
      %22 = dma.hbm_to_vmem [thread:$0]  %s0, 1536, %s17, [#allocation3], 384, 384, 24
    $region5: #{tpu_custom_call.1} parent=1 // pred_fallthru
      _
    // Predicated region
    $region6: #{tpu_custom_call.1} parent=1 // pred_check
      _
    $region7: #{tpu_custom_call.1} parent=1 // pred_check_branch
      %24 = sbr.rel (0) target = $region9
    $region8: #{tpu_custom_call.1} parent=1 // pred_region
      %s26 = ssub.s32 6144, 6144
      %27 = vsyncadd [#allocation6], %s26
      %s28 = sshll.u32 [#allocation5], 4
      %s29 = int_to_ptr.vmem [resolvable:$true] %s28
      %34 = dma.hbm_to_vmem [thread:$0]  %s1, 6144, %s29, [#allocation6], 64, 64, 4
    $region9: #{tpu_custom_call.1} parent=1 // pred_fallthru
      _
    // Predicated region
    $region10: #{tpu_custom_call.1} parent=1 // pred_check
      _
    $region11: #{tpu_custom_call.1} parent=1 // pred_check_branch
      %36 = sbr.rel (0) target = $region13
    $region12: #{tpu_custom_call.1} parent=1 // pred_region
      _
    $region13: #{tpu_custom_call.1} parent=1 // pred_fallthru
      _
    // Predicated region
    $region14: #{tpu_custom_call.1} parent=1 // pred_check
      _
    $region15: #{tpu_custom_call.1} parent=1 // pred_check_branch
      %38 = sbr.rel (0) target = $region17
    $region16: #{tpu_custom_call.1} parent=1 // pred_region
      %39 = dma.done [#allocation3], 1536
    $region17: #{tpu_custom_call.1} parent=1 // pred_fallthru
      _
    // Predicated region
    $region18: #{tpu_custom_call.1} parent=1 // pred_check
      _
    $region19: #{tpu_custom_call.1} parent=1 // pred_check_branch
      %41 = sbr.rel (0) target = $region21
    $region20: #{tpu_custom_call.1} parent=1 // pred_region
      %42 = dma.done [#allocation6], 6144
    $region21: #{tpu_custom_call.1} parent=1 // pred_fallthru
      _
    %v44 = vld [vmem:[#allocation2] sm:$0xff]
    %v45 = vld [vmem:[#allocation2 + $0x8] sm:$0xff]
    %v46 = vld [vmem:[#allocation2 + $0x10] sm:$0xff]
    %v47 = vld [vmem:[#allocation2 + $0x18] sm:$0xff]
    %v48 = vld [vmem:[#allocation2 + $0x20] sm:$0xff]
    %v49 = vld [vmem:[#allocation2 + $0x28] sm:$0xff]
    %v50 = vld [vmem:[#allocation2 + $0x30] sm:$0xff]
    %v51 = vld [vmem:[#allocation2 + $0x38] sm:$0xff]
    %v52 = vld [vmem:[#allocation2 + $0x40] sm:$0xff]
    %v53 = vld [vmem:[#allocation2 + $0x48] sm:$0xff]
    %v54 = vld [vmem:[#allocation2 + $0x50] sm:$0xff]
    %v55 = vld [vmem:[#allocation2 + $0x58] sm:$0xff]
    %v56 = vld [vmem:[#allocation5] sm:$0xf]
    %v57 = vld [vmem:[#allocation5 + $0x4] sm:$0xf]
    %v58 = vld [vmem:[#allocation5 + $0x8] sm:$0xf]
    %v59 = vld [vmem:[#allocation5 + $0xc] sm:$0xf]
    %v60 = vld [vmem:[#allocation5 + $0x10] sm:$0xf]
    %v61 = vld [vmem:[#allocation5 + $0x14] sm:$0xf]
    %v62 = vld [vmem:[#allocation5 + $0x18] sm:$0xf]
    %v63 = vld [vmem:[#allocation5 + $0x1c] sm:$0xf]
    %v64 = vld [vmem:[#allocation5 + $0x20] sm:$0xf]
    %v65 = vld [vmem:[#allocation5 + $0x24] sm:$0xf]
    %v66 = vld [vmem:[#allocation5 + $0x28] sm:$0xf]
    %v67 = vld [vmem:[#allocation5 + $0x2c] sm:$0xf]
    %v68 = vld [vmem:[#allocation5 + $0x30] sm:$0xf]
    %v69 = vld [vmem:[#allocation5 + $0x34] sm:$0xf]
    %v70 = vld [vmem:[#allocation5 + $0x38] sm:$0xf]
    %v71 = vld [vmem:[#allocation5 + $0x3c] sm:$0xf]
    %v72 = vld [vmem:[#allocation5 + $0x40] sm:$0xf]
    %v73 = vld [vmem:[#allocation5 + $0x44] sm:$0xf]
    %v74 = vld [vmem:[#allocation5 + $0x48] sm:$0xf]
    %v75 = vld [vmem:[#allocation5 + $0x4c] sm:$0xf]
    %v76 = vld [vmem:[#allocation5 + $0x50] sm:$0xf]
    %v77 = vld [vmem:[#allocation5 + $0x54] sm:$0xf]
    %v78 = vld [vmem:[#allocation5 + $0x58] sm:$0xf]
    %v79 = vld [vmem:[#allocation5 + $0x5c] sm:$0xf]
    %v80 = vld [vmem:[#allocation5 + $0x60] sm:$0xf]
    %v81 = vld [vmem:[#allocation5 + $0x64] sm:$0xf]
    %v82 = vld [vmem:[#allocation5 + $0x68] sm:$0xf]
    %v83 = vld [vmem:[#allocation5 + $0x6c] sm:$0xf]
    %v84 = vld [vmem:[#allocation5 + $0x70] sm:$0xf]
    %v85 = vld [vmem:[#allocation5 + $0x74] sm:$0xf]
    %v86 = vld [vmem:[#allocation5 + $0x78] sm:$0xf]
    %v87 = vld [vmem:[#allocation5 + $0x7c] sm:$0xf]
    %v88 = vld [vmem:[#allocation5 + $0x80] sm:$0xf]
    %v89 = vld [vmem:[#allocation5 + $0x84] sm:$0xf]
    %v90 = vld [vmem:[#allocation5 + $0x88] sm:$0xf]
    %v91 = vld [vmem:[#allocation5 + $0x8c] sm:$0xf]
    %v92 = vld [vmem:[#allocation5 + $0x90] sm:$0xf]
    %v93 = vld [vmem:[#allocation5 + $0x94] sm:$0xf]
    %v94 = vld [vmem:[#allocation5 + $0x98] sm:$0xf]
    %v95 = vld [vmem:[#allocation5 + $0x9c] sm:$0xf]
    %v96 = vld [vmem:[#allocation5 + $0xa0] sm:$0xf]
    %v97 = vld [vmem:[#allocation5 + $0xa4] sm:$0xf]
    %v98 = vld [vmem:[#allocation5 + $0xa8] sm:$0xf]
    %v99 = vld [vmem:[#allocation5 + $0xac] sm:$0xf]
    %v100 = vld [vmem:[#allocation5 + $0xb0] sm:$0xf]
    %v101 = vld [vmem:[#allocation5 + $0xb4] sm:$0xf]
    %v102 = vld [vmem:[#allocation5 + $0xb8] sm:$0xf]
    %v103 = vld [vmem:[#allocation5 + $0xbc] sm:$0xf]
    %v104 = vld [vmem:[#allocation5 + $0xc0] sm:$0xf]
    %v105 = vld [vmem:[#allocation5 + $0xc4] sm:$0xf]
    %v106 = vld [vmem:[#allocation5 + $0xc8] sm:$0xf]
    %v107 = vld [vmem:[#allocation5 + $0xcc] sm:$0xf]
    %v108 = vld [vmem:[#allocation5 + $0xd0] sm:$0xf]
    %v109 = vld [vmem:[#allocation5 + $0xd4] sm:$0xf]
    %v110 = vld [vmem:[#allocation5 + $0xd8] sm:$0xf]
    %v111 = vld [vmem:[#allocation5 + $0xdc] sm:$0xf]
    %v112 = vld [vmem:[#allocation5 + $0xe0] sm:$0xf]
    %v113 = vld [vmem:[#allocation5 + $0xe4] sm:$0xf]
    %v114 = vld [vmem:[#allocation5 + $0xe8] sm:$0xf]
    %v115 = vld [vmem:[#allocation5 + $0xec] sm:$0xf]
    %v116 = vld [vmem:[#allocation5 + $0xf0] sm:$0xf]
    %v117 = vld [vmem:[#allocation5 + $0xf4] sm:$0xf]
    %v118 = vld [vmem:[#allocation5 + $0xf8] sm:$0xf]
    %v119 = vld [vmem:[#allocation5 + $0xfc] sm:$0xf]
    %v120 = vld [vmem:[#allocation5 + $0x100] sm:$0xf]
    %v121 = vld [vmem:[#allocation5 + $0x104] sm:$0xf]
    %v122 = vld [vmem:[#allocation5 + $0x108] sm:$0xf]
    %v123 = vld [vmem:[#allocation5 + $0x10c] sm:$0xf]
    %v124 = vld [vmem:[#allocation5 + $0x110] sm:$0xf]
    %v125 = vld [vmem:[#allocation5 + $0x114] sm:$0xf]
    %v126 = vld [vmem:[#allocation5 + $0x118] sm:$0xf]
    %v127 = vld [vmem:[#allocation5 + $0x11c] sm:$0xf]
    %v128 = vld [vmem:[#allocation5 + $0x120] sm:$0xf]
    %v129 = vld [vmem:[#allocation5 + $0x124] sm:$0xf]
    %v130 = vld [vmem:[#allocation5 + $0x128] sm:$0xf]
    %v131 = vld [vmem:[#allocation5 + $0x12c] sm:$0xf]
    %v132 = vld [vmem:[#allocation5 + $0x130] sm:$0xf]
    %v133 = vld [vmem:[#allocation5 + $0x134] sm:$0xf]
    %v134 = vld [vmem:[#allocation5 + $0x138] sm:$0xf]
    %v135 = vld [vmem:[#allocation5 + $0x13c] sm:$0xf]
    %v136 = vld [vmem:[#allocation5 + $0x140] sm:$0xf]
    %v137 = vld [vmem:[#allocation5 + $0x144] sm:$0xf]
    %v138 = vld [vmem:[#allocation5 + $0x148] sm:$0xf]
    %v139 = vld [vmem:[#allocation5 + $0x14c] sm:$0xf]
    %v140 = vld [vmem:[#allocation5 + $0x150] sm:$0xf]
    %v141 = vld [vmem:[#allocation5 + $0x154] sm:$0xf]
    %v142 = vld [vmem:[#allocation5 + $0x158] sm:$0xf]
    %v143 = vld [vmem:[#allocation5 + $0x15c] sm:$0xf]
    %v144 = vld [vmem:[#allocation5 + $0x160] sm:$0xf]
    %v145 = vld [vmem:[#allocation5 + $0x164] sm:$0xf]
    %v146 = vld [vmem:[#allocation5 + $0x168] sm:$0xf]
    %v147 = vld [vmem:[#allocation5 + $0x16c] sm:$0xf]
    %v148 = vld [vmem:[#allocation5 + $0x170] sm:$0xf]
    %v149 = vld [vmem:[#allocation5 + $0x174] sm:$0xf]
    %v150 = vld [vmem:[#allocation5 + $0x178] sm:$0xf]
    %v151 = vld [vmem:[#allocation5 + $0x17c] sm:$0xf]
    %v152 = vld [vmem:[%s2] sm:$0x1]
    %v154 = vlaneseq
    %v155 = vshrl.u32 %v154, 7
    %v156 = vsub.s32 0, %v155
    %v157 = vrot.slane %v152, %v156
    %v171 = vunpack.c.l.b16 %v44
    %v172 = vunpack.c.h.b16 %v44
    %v173 = vunpack.c.l.b16 %v45
    %v174 = vunpack.c.h.b16 %v45
    %v175 = vunpack.c.l.b16 %v46
    %v176 = vunpack.c.h.b16 %v46
    %v177 = vunpack.c.l.b16 %v47
    %v178 = vunpack.c.h.b16 %v47
    %v179 = vunpack.c.l.b16 %v48
    %v180 = vunpack.c.h.b16 %v48
    %v181 = vunpack.c.l.b16 %v49
    %v182 = vunpack.c.h.b16 %v49
    %v183 = vunpack.c.l.b16 %v50
    %v184 = vunpack.c.h.b16 %v50
    %v185 = vunpack.c.l.b16 %v51
    %v186 = vunpack.c.h.b16 %v51
    %v187 = vunpack.c.l.b16 %v52
    %v188 = vunpack.c.h.b16 %v52
    %v189 = vunpack.c.l.b16 %v53
    %v190 = vunpack.c.h.b16 %v53
    %v191 = vunpack.c.l.b16 %v54
    %v192 = vunpack.c.h.b16 %v54
    %v193 = vunpack.c.l.b16 %v55
    %v194 = vunpack.c.h.b16 %v55
    %v195 = vpack.c.b16 %v177, %v171
    %v196 = vpack.c.b16 %v178, %v172
    %v197 = vpack.c.b16 %v179, %v173
    %v198 = vpack.c.b16 %v180, %v174
    %v199 = vpack.c.b16 %v181, %v175
    %v200 = vpack.c.b16 %v182, %v176
    %v201 = vpack.c.b16 %v189, %v183
    %v202 = vpack.c.b16 %v190, %v184
    %v203 = vpack.c.b16 %v191, %v185
    %v204 = vpack.c.b16 %v192, %v186
    %v205 = vpack.c.b16 %v193, %v187
    %v206 = vpack.c.b16 %v194, %v188
    %v315 = vunpack.c.l.b16 %v56
    %v316 = vunpack.c.l.b16 %v57
    %v317 = vunpack.c.l.b16 %v58
    %v318 = vunpack.c.l.b16 %v59
    %v319 = vunpack.c.l.b16 %v60
    %v320 = vunpack.c.l.b16 %v61
    %v321 = vunpack.c.l.b16 %v62
    %v322 = vunpack.c.l.b16 %v63
    %v323 = vunpack.c.l.b16 %v64
    %v324 = vunpack.c.l.b16 %v65
    %v325 = vunpack.c.l.b16 %v66
    %v326 = vunpack.c.l.b16 %v67
    %v327 = vunpack.c.l.b16 %v68
    %v328 = vunpack.c.l.b16 %v69
    %v329 = vunpack.c.l.b16 %v70
    %v330 = vunpack.c.l.b16 %v71
    %v331 = vunpack.c.l.b16 %v72
    %v332 = vunpack.c.l.b16 %v73
    %v333 = vunpack.c.l.b16 %v74
    %v334 = vunpack.c.l.b16 %v75
    %v335 = vunpack.c.l.b16 %v76
    %v336 = vunpack.c.l.b16 %v77
    %v337 = vunpack.c.l.b16 %v78
    %v338 = vunpack.c.l.b16 %v79
    %v339 = vunpack.c.l.b16 %v80
    %v340 = vunpack.c.l.b16 %v81
    %v341 = vunpack.c.l.b16 %v82
    %v342 = vunpack.c.l.b16 %v83
    %v343 = vunpack.c.l.b16 %v84
    %v344 = vunpack.c.l.b16 %v85
    %v345 = vunpack.c.l.b16 %v86
    %v346 = vunpack.c.l.b16 %v87
    %v347 = vunpack.c.l.b16 %v88
    %v348 = vunpack.c.l.b16 %v89
    %v349 = vunpack.c.l.b16 %v90
    %v350 = vunpack.c.l.b16 %v91
    %v351 = vunpack.c.l.b16 %v92
    %v352 = vunpack.c.l.b16 %v93
    %v353 = vunpack.c.l.b16 %v94
    %v354 = vunpack.c.l.b16 %v95
    %v355 = vunpack.c.l.b16 %v96
    %v356 = vunpack.c.l.b16 %v97
    %v357 = vunpack.c.l.b16 %v98
    %v358 = vunpack.c.l.b16 %v99
    %v359 = vunpack.c.l.b16 %v100
    %v360 = vunpack.c.l.b16 %v101
    %v361 = vunpack.c.l.b16 %v102
    %v362 = vunpack.c.l.b16 %v103
    %v363 = vunpack.c.l.b16 %v104
    %v364 = vunpack.c.l.b16 %v105
    %v365 = vunpack.c.l.b16 %v106
    %v366 = vunpack.c.l.b16 %v107
    %v367 = vunpack.c.l.b16 %v108
    %v368 = vunpack.c.l.b16 %v109
    %v369 = vunpack.c.l.b16 %v110
    %v370 = vunpack.c.l.b16 %v111
    %v371 = vunpack.c.l.b16 %v112
    %v372 = vunpack.c.l.b16 %v113
    %v373 = vunpack.c.l.b16 %v114
    %v374 = vunpack.c.l.b16 %v115
    %v375 = vunpack.c.l.b16 %v116
    %v376 = vunpack.c.l.b16 %v117
    %v377 = vunpack.c.l.b16 %v118
    %v378 = vunpack.c.l.b16 %v119
    %v379 = vunpack.c.l.b16 %v120
    %v380 = vunpack.c.l.b16 %v121
    %v381 = vunpack.c.l.b16 %v122
    %v382 = vunpack.c.l.b16 %v123
    %v383 = vunpack.c.l.b16 %v124
    %v384 = vunpack.c.l.b16 %v125
    %v385 = vunpack.c.l.b16 %v126
    %v386 = vunpack.c.l.b16 %v127
    %v387 = vunpack.c.l.b16 %v128
    %v388 = vunpack.c.l.b16 %v129
    %v389 = vunpack.c.l.b16 %v130
    %v390 = vunpack.c.l.b16 %v131
    %v391 = vunpack.c.l.b16 %v132
    %v392 = vunpack.c.l.b16 %v133
    %v393 = vunpack.c.l.b16 %v134
    %v394 = vunpack.c.l.b16 %v135
    %v395 = vunpack.c.l.b16 %v136
    %v396 = vunpack.c.l.b16 %v137
    %v397 = vunpack.c.l.b16 %v138
    %v398 = vunpack.c.l.b16 %v139
    %v399 = vunpack.c.l.b16 %v140
    %v400 = vunpack.c.l.b16 %v141
    %v401 = vunpack.c.l.b16 %v142
    %v402 = vunpack.c.l.b16 %v143
    %v403 = vunpack.c.l.b16 %v144
    %v404 = vunpack.c.l.b16 %v145
    %v405 = vunpack.c.l.b16 %v146
    %v406 = vunpack.c.l.b16 %v147
    %v407 = vunpack.c.l.b16 %v148
    %v408 = vunpack.c.l.b16 %v149
    %v409 = vunpack.c.l.b16 %v150
    %v410 = vunpack.c.l.b16 %v151
    %v411 = vpack.c.b16 %v316, %v315
    %v412 = vpack.c.b16 %v318, %v317
    %v413 = vpack.c.b16 %v320, %v319
    %v414 = vpack.c.b16 %v322, %v321
    %v415 = vpack.c.b16 %v324, %v323
    %v416 = vpack.c.b16 %v326, %v325
    %v417 = vpack.c.b16 %v328, %v327
    %v418 = vpack.c.b16 %v330, %v329
    %v419 = vpack.c.b16 %v332, %v331
    %v420 = vpack.c.b16 %v334, %v333
    %v421 = vpack.c.b16 %v336, %v335
    %v422 = vpack.c.b16 %v338, %v337
    %v423 = vpack.c.b16 %v340, %v339
    %v424 = vpack.c.b16 %v342, %v341
    %v425 = vpack.c.b16 %v344, %v343
    %v426 = vpack.c.b16 %v346, %v345
    %v427 = vpack.c.b16 %v348, %v347
    %v428 = vpack.c.b16 %v350, %v349
    %v429 = vpack.c.b16 %v352, %v351
    %v430 = vpack.c.b16 %v354, %v353
    %v431 = vpack.c.b16 %v356, %v355
    %v432 = vpack.c.b16 %v358, %v357
    %v433 = vpack.c.b16 %v360, %v359
    %v434 = vpack.c.b16 %v362, %v361
    %v435 = vpack.c.b16 %v364, %v363
    %v436 = vpack.c.b16 %v366, %v365
    %v437 = vpack.c.b16 %v368, %v367
    %v438 = vpack.c.b16 %v370, %v369
    %v439 = vpack.c.b16 %v372, %v371
    %v440 = vpack.c.b16 %v374, %v373
    %v441 = vpack.c.b16 %v376, %v375
    %v442 = vpack.c.b16 %v378, %v377
    %v443 = vpack.c.b16 %v380, %v379
    %v444 = vpack.c.b16 %v382, %v381
    %v445 = vpack.c.b16 %v384, %v383
    %v446 = vpack.c.b16 %v386, %v385
    %v447 = vpack.c.b16 %v388, %v387
    %v448 = vpack.c.b16 %v390, %v389
    %v449 = vpack.c.b16 %v392, %v391
    %v450 = vpack.c.b16 %v394, %v393
    %v451 = vpack.c.b16 %v396, %v395
    %v452 = vpack.c.b16 %v398, %v397
    %v453 = vpack.c.b16 %v400, %v399
    %v454 = vpack.c.b16 %v402, %v401
    %v455 = vpack.c.b16 %v404, %v403
    %v456 = vpack.c.b16 %v406, %v405
    %v457 = vpack.c.b16 %v408, %v407
    %v458 = vpack.c.b16 %v410, %v409
    %507 = vmatprep.subr.bf16.mxu0 0
    %508 = vmatpush1.bf16.msra.mxu0 %v411
    %509 = vmatprep.subr.bf16.mxu0 0
    %510 = vmatpush1.bf16.msra.mxu0 %v412
    %511 = vmatprep.subr.bf16.mxu0 0
    %512 = vmatpush1.bf16.msra.mxu0 %v413
    %513 = vmatprep.subr.bf16.mxu0 0
    %514 = vmatpush1.bf16.msra.mxu0 %v414
    %515 = vmatprep.subr.bf16.mxu0 0
    %516 = vmatpush1.bf16.msra.mxu0 %v415
    %517 = vmatprep.subr.bf16.mxu0 0
    %518 = vmatpush1.bf16.msra.mxu0 %v416
    %519 = vmatprep.subr.bf16.mxu0 0
    %520 = vmatpush1.bf16.msra.mxu0 %v417
    %521 = vmatprep.subr.bf16.mxu0 0
    %522 = vmatpush1.bf16.msra.mxu0 %v418
    %523 = vmatprep.subr.bf16.mxu0 0
    %524 = vmatpush1.bf16.msra.mxu0 %v419
    %525 = vmatprep.subr.bf16.mxu0 0
    %526 = vmatpush1.bf16.msra.mxu0 %v420
    %527 = vmatprep.subr.bf16.mxu0 0
    %528 = vmatpush1.bf16.msra.mxu0 %v421
    %529 = vmatprep.subr.bf16.mxu0 0
    %530 = vmatpush1.bf16.msra.mxu0 %v422
    %531 = vmatprep.subr.bf16.mxu0 0
    %532 = vmatpush1.bf16.msra.mxu0 %v423
    %533 = vmatprep.subr.bf16.mxu0 0
    %534 = vmatpush1.bf16.msra.mxu0 %v424
    %535 = vmatprep.subr.bf16.mxu0 0
    %536 = vmatpush1.bf16.msra.mxu0 %v425
    %537 = vmatprep.subr.bf16.mxu0 0
    %538 = vmatpush1.bf16.msra.mxu0 %v426
    %539 = vmatprep.mubr.bf16.mxu0 %v196
    %540 = vmatmul.mubr.bf16.gmra.mrb[0].mxu0 %v195
    %v541 = vpop.f32.mrb[0].mxu0
    %v542 = vadd.f32 %v157, %v541
    %v543 = vpop.f32.mrb[0].mxu0
    %v544 = vpop.f32.mrb[0].mxu0
    %v545 = vadd.f32 %v157, %v544
    %v546 = vpop.f32.mrb[0].mxu0
    %547 = vmatprep.mubr.bf16.mxu0 %v202
    %548 = vmatmul.mubr.bf16.gmra.mrb[0].mxu0 %v201
    %v549 = vpop.f32.mrb[0].mxu0
    %v550 = vadd.f32 %v157, %v549
    %v551 = vpop.f32.mrb[0].mxu0
    %v552 = vpop.f32.mrb[0].mxu0
    %v553 = vadd.f32 %v157, %v552
    %v554 = vpop.f32.mrb[0].mxu0
    %555 = vdwg.mxu0
    %556 = vmatprep.subr.bf16.mxu0 0
    %557 = vmatpush1.bf16.msra.mxu0 %v427
    %558 = vmatprep.subr.bf16.mxu0 0
    %559 = vmatpush1.bf16.msra.mxu0 %v428
    %560 = vmatprep.subr.bf16.mxu0 0
    %561 = vmatpush1.bf16.msra.mxu0 %v429
    %562 = vmatprep.subr.bf16.mxu0 0
    %563 = vmatpush1.bf16.msra.mxu0 %v430
    %564 = vmatprep.subr.bf16.mxu0 0
    %565 = vmatpush1.bf16.msra.mxu0 %v431
    %566 = vmatprep.subr.bf16.mxu0 0
    %567 = vmatpush1.bf16.msra.mxu0 %v432
    %568 = vmatprep.subr.bf16.mxu0 0
    %569 = vmatpush1.bf16.msra.mxu0 %v433
    %570 = vmatprep.subr.bf16.mxu0 0
    %571 = vmatpush1.bf16.msra.mxu0 %v434
    %572 = vmatprep.subr.bf16.mxu0 0
    %573 = vmatpush1.bf16.msra.mxu0 %v435
    %574 = vmatprep.subr.bf16.mxu0 0
    %575 = vmatpush1.bf16.msra.mxu0 %v436
    %576 = vmatprep.subr.bf16.mxu0 0
    %577 = vmatpush1.bf16.msra.mxu0 %v437
    %578 = vmatprep.subr.bf16.mxu0 0
    %579 = vmatpush1.bf16.msra.mxu0 %v438
    %580 = vmatprep.subr.bf16.mxu0 0
    %581 = vmatpush1.bf16.msra.mxu0 %v439
    %582 = vmatprep.subr.bf16.mxu0 0
    %583 = vmatpush1.bf16.msra.mxu0 %v440
    %584 = vmatprep.subr.bf16.mxu0 0
    %585 = vmatpush1.bf16.msra.mxu0 %v441
    %586 = vmatprep.subr.bf16.mxu0 0
    %587 = vmatpush1.bf16.msra.mxu0 %v442
    %588 = vmatprep.mubr.bf16.mxu0 %v198
    %589 = vmatmul.mubr.bf16.gmra.mrb[0].mxu0 %v197
    %v590 = vpop.f32.mrb[0].mxu0
    %v591 = vadd.f32 %v542, %v590
    %v592 = vpop.f32.mrb[0].mxu0
    %v593 = vpop.f32.mrb[0].mxu0
    %v594 = vadd.f32 %v545, %v593
    %v595 = vpop.f32.mrb[0].mxu0
    %596 = vmatprep.mubr.bf16.mxu0 %v204
    %597 = vmatmul.mubr.bf16.gmra.mrb[0].mxu0 %v203
    %v598 = vpop.f32.mrb[0].mxu0
    %v599 = vadd.f32 %v550, %v598
    %v600 = vpop.f32.mrb[0].mxu0
    %v601 = vpop.f32.mrb[0].mxu0
    %v602 = vadd.f32 %v553, %v601
    %v603 = vpop.f32.mrb[0].mxu0
    %604 = vdwg.mxu0
    %605 = vmatprep.subr.bf16.mxu0 0
    %606 = vmatpush1.bf16.msra.mxu0 %v443
    %607 = vmatprep.subr.bf16.mxu0 0
    %608 = vmatpush1.bf16.msra.mxu0 %v444
    %609 = vmatprep.subr.bf16.mxu0 0
    %610 = vmatpush1.bf16.msra.mxu0 %v445
    %611 = vmatprep.subr.bf16.mxu0 0
    %612 = vmatpush1.bf16.msra.mxu0 %v446
    %613 = vmatprep.subr.bf16.mxu0 0
    %614 = vmatpush1.bf16.msra.mxu0 %v447
    %615 = vmatprep.subr.bf16.mxu0 0
    %616 = vmatpush1.bf16.msra.mxu0 %v448
    %617 = vmatprep.subr.bf16.mxu0 0
    %618 = vmatpush1.bf16.msra.mxu0 %v449
    %619 = vmatprep.subr.bf16.mxu0 0
    %620 = vmatpush1.bf16.msra.mxu0 %v450
    %621 = vmatprep.subr.bf16.mxu0 0
    %622 = vmatpush1.bf16.msra.mxu0 %v451
    %623 = vmatprep.subr.bf16.mxu0 0
    %624 = vmatpush1.bf16.msra.mxu0 %v452
    %625 = vmatprep.subr.bf16.mxu0 0
    %626 = vmatpush1.bf16.msra.mxu0 %v453
    %627 = vmatprep.subr.bf16.mxu0 0
    %628 = vmatpush1.bf16.msra.mxu0 %v454
    %629 = vmatprep.subr.bf16.mxu0 0
    %630 = vmatpush1.bf16.msra.mxu0 %v455
    %631 = vmatprep.subr.bf16.mxu0 0
    %632 = vmatpush1.bf16.msra.mxu0 %v456
    %633 = vmatprep.subr.bf16.mxu0 0
    %634 = vmatpush1.bf16.msra.mxu0 %v457
    %635 = vmatprep.subr.bf16.mxu0 0
    %636 = vmatpush1.bf16.msra.mxu0 %v458
    %637 = vmatprep.mubr.bf16.mxu0 %v200
    %638 = vmatmul.mubr.bf16.gmra.mrb[0].mxu0 %v199
    %v639 = vpop.f32.mrb[0].mxu0
    %v640 = vadd.f32 %v591, %v639
    %v641 = vpop.f32.mrb[0].mxu0
    %v642 = vpop.f32.mrb[0].mxu0
    %v643 = vadd.f32 %v594, %v642
    %v644 = vpop.f32.mrb[0].mxu0
    %645 = vmatprep.mubr.bf16.mxu0 %v206
    %646 = vmatmul.mubr.bf16.gmra.mrb[0].mxu0 %v205
    %v647 = vpop.f32.mrb[0].mxu0
    %v648 = vadd.f32 %v599, %v647
    %v649 = vpop.f32.mrb[0].mxu0
    %v650 = vpop.f32.mrb[0].mxu0
    %v651 = vadd.f32 %v602, %v650
    %v652 = vpop.f32.mrb[0].mxu0
    %653 = vdwg.mxu0
    %654 = vst [vmem:[#allocation7] sm:$0xff] %v640
    %655 = vst [vmem:[#allocation7 + $0x8] sm:$0xff] %v643
    %656 = vst [vmem:[#allocation7 + $0x10] sm:$0xff] %v648
    %657 = vst [vmem:[#allocation7 + $0x18] sm:$0xff] %v651
    // Predicated region
    $region22: #{tpu_custom_call.1} parent=1 // pred_check
      _
    $region23: #{tpu_custom_call.1} parent=1 // pred_check_branch
      %659 = sbr.rel (0) target = $region25
    $region24: #{tpu_custom_call.1} parent=1 // pred_region
      %s661 = ssub.s32 512, 512
      %662 = vsyncadd [#allocation4], %s661
      %s663 = sshll.u32 [#allocation7], 4
      %s664 = int_to_ptr.vmem [resolvable:$true] %s663
      %669 = dma.vmem_to_hbm [thread:$0]  %s664, 512, %s3, [#allocation4], 128, 128, 8
    $region25: #{tpu_custom_call.1} parent=1 // pred_fallthru
      _
    // Predicated region
    $region26: #{tpu_custom_call.1} parent=1 // pred_check
      _
    $region27: #{tpu_custom_call.1} parent=1 // pred_check_branch
      %671 = sbr.rel (0) target = $region29
    $region28: #{tpu_custom_call.1} parent=1 // pred_region
      %672 = dma.done [#allocation4], 512
    $region29: #{tpu_custom_call.1} parent=1 // pred_fallthru
      _
    %673 = vsyncpa [#allocation3], 1
    %674 = vsyncpa [#allocation6], 1
    %675 = vsyncpa [#allocation4], 1

</llo_original>
